<compile_context>
chip_gen: v6e
topology: v6e:2x2x1
jax: 0.10.0
libtpu: 0.0.40
codegen_flags: <defaults>
</compile_context>

<pallas_src>
import math
import jax
import jax.numpy as jnp
from jax.experimental import pallas as pl
from jax.experimental.pallas import tpu as pltpu


# ----------------------------------------------------------------------------
# helpers
# ----------------------------------------------------------------------------
def _round_up(x, m):
    return (x + m - 1) // m * m


def _gelu(x, approximate):
    # nn.GELU() default is the exact erf-based GELU; tanh approx optional.
    if approximate:
        return jax.nn.gelu(x, approximate=True)
    return 0.5 * x * (1.0 + jax.lax.erf(x * (1.0 / math.sqrt(2.0))))


def _resident_spec(block_shape):
    """BlockSpec for a grid-invariant (weight/bias) block: single-buffered."""
    index_map = lambda i: tuple(0 for _ in block_shape)
    try:
        return pl.BlockSpec(block_shape, index_map, pipeline_mode=pl.Buffered(1))
    except TypeError:
        # Older jax without pipeline_mode: fall back to default double-buffer.
        return pl.BlockSpec(block_shape, index_map)


def _vmem_estimate_bytes(tm, d_in, h, d_out, cbytes, obytes):
    weights = (d_in * h + h * d_out) * cbytes          # single-buffered
    biases = 2 * (h + d_out) * 4                       # f32 biases
    x_tiles = 2 * tm * d_in * cbytes                   # double-buffered input
    o_tiles = 2 * tm * d_out * obytes                  # double-buffered output
    interm = tm * h * 4 + tm * max(h, d_out) * 4       # f32 intermediates
    return weights + biases + x_tiles + o_tiles + interm


# ----------------------------------------------------------------------------
# kernel
# ----------------------------------------------------------------------------
def _make_mlp_kernel(approximate_gelu):
    def mlp_kernel(x_ref, w1_ref, b1_ref, w2_ref, b2_ref, o_ref):
        # x_ref:  (tm, D_in)
        # w1_ref: (D_in, H)    b1_ref: (1, H)      (f32)
        # w2_ref: (H, D_out)   b2_ref: (1, D_out)  (f32)
        # o_ref:  (tm, D_out)
        x = x_ref[...]
        h = jnp.dot(x, w1_ref[...], preferred_element_type=jnp.float32)
        h = h + b1_ref[...]                      # bias add in f32
        h = _gelu(h, approximate_gelu)
        # dropout(p=0.0) is identity -> no-op
        y = jnp.dot(h.astype(w2_ref.dtype), w2_ref[...],
                    preferred_element_type=jnp.float32)
        y = y + b2_ref[...]
        o_ref[...] = y.astype(o_ref.dtype)

    return mlp_kernel


# ----------------------------------------------------------------------------
# wrapper
# ----------------------------------------------------------------------------
def mlp_forward(x, w1, b1, w2, b2, *, tm=512, compute_dtype=None,
                approximate_gelu=False, vmem_budget_bytes=44 << 20):
    """x: (..., D_in) -> (..., D_out). Hot path (matmuls + GELU) in Pallas.

    compute_dtype: dtype the matmul operands are cast to (e.g. jnp.bfloat16
    for ~3x MXU throughput & half the weight VMEM). Default: x.dtype.
    """
    orig_shape = x.shape
    d_in = orig_shape[-1]
    h = w1.shape[1]
    d_out = w2.shape[1]
    assert w1.shape == (d_in, h) and w2.shape == (h, d_out)
    assert b1.shape[-1] == h and b2.shape[-1] == d_out

    out_dtype = x.dtype
    cdt = jnp.dtype(compute_dtype) if compute_dtype is not None else jnp.dtype(x.dtype)
    cbytes = cdt.itemsize
    obytes = jnp.dtype(out_dtype).itemsize

    x2 = x.reshape(-1, d_in)
    m = x2.shape[0]

    # --- lane-dense feature padding (multiples of 128) ----------------------
    d_in_p = _round_up(d_in, 128)
    h_p = _round_up(h, 128)
    d_out_p = _round_up(d_out, 128)

    # --- choose token tile: big, lane/sublane friendly, fits VMEM budget ----
    tm_eff = max(128, min(tm, _round_up(m, 128)))
    tm_eff = _round_up(tm_eff, 128)
    while (tm_eff > 128 and
           _vmem_estimate_bytes(tm_eff, d_in_p, h_p, d_out_p, cbytes, obytes)
           > vmem_budget_bytes):
        tm_eff //= 2
    m_p = _round_up(m, tm_eff)

    est = _vmem_estimate_bytes(tm_eff, d_in_p, h_p, d_out_p, cbytes, obytes)
    vmem_limit = int(min(max(int(est * 1.5) + (8 << 20), 32 << 20), 64 << 20))

    # --- pad + cast operands -------------------------------------------------
    x2p = jnp.zeros((m_p, d_in_p), cdt).at[:m, :d_in].set(x2.astype(cdt))
    w1p = jnp.zeros((d_in_p, h_p), cdt).at[:d_in, :h].set(w1.astype(cdt))
    w2p = jnp.zeros((h_p, d_out_p), cdt).at[:h, :d_out].set(w2.astype(cdt))
    b1p = jnp.zeros((1, h_p), jnp.float32).at[0, :h].set(b1.astype(jnp.float32))
    b2p = jnp.zeros((1, d_out_p), jnp.float32).at[0, :d_out].set(b2.astype(jnp.float32))

    kernel = _make_mlp_kernel(approximate_gelu)

    out = pl.pallas_call(
        kernel,
        out_shape=jax.ShapeDtypeStruct((m_p, d_out_p), out_dtype),
        grid_spec=pltpu.PrefetchScalarGridSpec(
            num_scalar_prefetch=0,
            grid=(m_p // tm_eff,),
            in_specs=[
                pl.BlockSpec((tm_eff, d_in_p), lambda i: (i, 0)),
                _resident_spec((d_in_p, h_p)),
                _resident_spec((1, h_p)),
                _resident_spec((h_p, d_out_p)),
                _resident_spec((1, d_out_p)),
            ],
            out_specs=pl.BlockSpec((tm_eff, d_out_p), lambda i: (i, 0)),
        ),
        compiler_params=pltpu.CompilerParams(
            dimension_semantics=("parallel",),
            vmem_limit_bytes=vmem_limit,
        ),
    )(x2p, w1p, b1p, w2p, b2p)

    out = out[:m, :d_out]
    return out.reshape(*orig_shape[:-1], d_out)


# ----------------------------------------------------------------------------
# params / test
# ----------------------------------------------------------------------------
def init_mlp_params(key, in_features, hidden_features, out_features, dtype=jnp.float32):
    """Deterministic init mimicking nn.Linear's default (kaiming-uniform-ish)."""
    k1, k2, k3, k4 = jax.random.split(key, 4)
    bound1 = 1.0 / math.sqrt(in_features)
    bound2 = 1.0 / math.sqrt(hidden_features)
    # Stored as (in, out) so the kernel computes x @ W + b.
    w1 = jax.random.uniform(k1, (in_features, hidden_features), dtype, -bound1, bound1)
    b1 = jax.random.uniform(k2, (hidden_features,), dtype, -bound1, bound1)
    w2 = jax.random.uniform(k3, (hidden_features, out_features), dtype, -bound2, bound2)
    b2 = jax.random.uniform(k4, (out_features,), dtype, -bound2, bound2)
    return w1, b1, w2, b2


def _reference(x, w1, b1, w2, b2):
    h = jnp.dot(x, w1) + b1
    h = 0.5 * h * (1.0 + jax.lax.erf(h / jnp.sqrt(2.0)))
    return jnp.dot(h, w2) + b2


if __name__ == "__main__":
    key = jax.random.PRNGKey(0)
    kx, kp = jax.random.split(key)

    B, N = 2, 8                 # batch, sequence length (tokens) -> 16 tokens
    in_features = 32
    hidden_features = 64
    out_features = 32

    x = jax.random.normal(kx, (B, N, in_features), dtype=jnp.float32)
    w1, b1, w2, b2 = init_mlp_params(kp, in_features, hidden_features, out_features)

    ref = _reference(x, w1, b1, w2, b2)

    # Full-precision path (matches PyTorch fp32 semantics).
    y = mlp_forward(x, w1, b1, w2, b2)
    y = jax.block_until_ready(y)
    assert y.shape == (B, N, out_features)
    assert jnp.allclose(y, ref, atol=1e-5, rtol=1e-5)

    # bf16 compute path (the recommended fast path for ViT-scale dims).
    y_bf16 = mlp_forward(x, w1, b1, w2, b2, compute_dtype=jnp.bfloat16)
    y_bf16 = jax.block_until_ready(y_bf16)
    assert y_bf16.shape == (B, N, out_features)
    assert jnp.allclose(y_bf16, ref, atol=5e-2, rtol=5e-2)

    print("KERNEL_OK")
</pallas_src>

<mosaic_0001>
module attributes {stable_mosaic.version = 11 : i64} {
  func.func @mlp_kernel(%arg0: i32, %arg1: memref<128x128xf32, #tpu.memory_space<vmem>>, %arg2: memref<128x128xf32, #tpu.memory_space<vmem>>, %arg3: memref<1x128xf32, #tpu.memory_space<vmem>>, %arg4: memref<128x128xf32, #tpu.memory_space<vmem>>, %arg5: memref<1x128xf32, #tpu.memory_space<vmem>>, %arg6: memref<128x128xf32, #tpu.memory_space<vmem>>) attributes {dimension_semantics = [#tpu.dimension_semantics<parallel>], iteration_bounds = array<i64: 1>, scalar_prefetch = 0 : i64, scratch_operands = 0 : i64, tpu.core_type = #tpu.core_type<tc>, window_params = [{transform_indices = @transform_0, window_bounds = array<i64: 128, 128>}, {pipeline_mode = #tpu.pipeline_mode<synchronous>, transform_indices = @transform_1, window_bounds = array<i64: 128, 128>}, {pipeline_mode = #tpu.pipeline_mode<synchronous>, transform_indices = @transform_2, window_bounds = array<i64: 1, 128>}, {pipeline_mode = #tpu.pipeline_mode<synchronous>, transform_indices = @transform_3, window_bounds = array<i64: 128, 128>}, {pipeline_mode = #tpu.pipeline_mode<synchronous>, transform_indices = @transform_4, window_bounds = array<i64: 1, 128>}, {transform_indices = @transform_5, window_bounds = array<i64: 128, 128>}]} {
    %c0 = arith.constant 0 : index
    %c0_0 = arith.constant 0 : index
    %0 = vector.load %arg1[%c0, %c0_0] : memref<128x128xf32, #tpu.memory_space<vmem>>, vector<128x128xf32>
    %c0_1 = arith.constant 0 : index
    %c0_2 = arith.constant 0 : index
    %1 = vector.load %arg2[%c0_1, %c0_2] : memref<128x128xf32, #tpu.memory_space<vmem>>, vector<128x128xf32>
    %cst = arith.constant dense<0.000000e+00> : vector<128x128xf32>
    %2 = tpu.matmul %0, %1, %cst {dimension_numbers = #tpu.dot_dimension_numbers<[1], [0], [0], [1], [0, 0, 1, 1], [], []>} : vector<128x128xf32>, vector<128x128xf32>, vector<128x128xf32> -> vector<128x128xf32>
    %c0_3 = arith.constant 0 : index
    %c0_4 = arith.constant 0 : index
    %3 = vector.load %arg3[%c0_3, %c0_4] : memref<1x128xf32, #tpu.memory_space<vmem>>, vector<1x128xf32>
    %4 = vector.broadcast %3 : vector<1x128xf32> to vector<128x128xf32>
    %5 = arith.addf %2, %4 : vector<128x128xf32>
    %cst_5 = arith.constant 5.000000e-01 : f32
    %6 = vector.broadcast %cst_5 : f32 to vector<128x128xf32>
    %7 = arith.mulf %6, %5 : vector<128x128xf32>
    %cst_6 = arith.constant 0.707106769 : f32
    %8 = vector.broadcast %cst_6 : f32 to vector<128x128xf32>
    %9 = arith.mulf %5, %8 : vector<128x128xf32>
    %10 = math.erf %9 : vector<128x128xf32>
    %cst_7 = arith.constant 1.000000e+00 : f32
    %11 = vector.broadcast %cst_7 : f32 to vector<128x128xf32>
    %12 = arith.addf %11, %10 : vector<128x128xf32>
    %13 = arith.mulf %7, %12 : vector<128x128xf32>
    %c0_8 = arith.constant 0 : index
    %c0_9 = arith.constant 0 : index
    %14 = vector.load %arg4[%c0_8, %c0_9] : memref<128x128xf32, #tpu.memory_space<vmem>>, vector<128x128xf32>
    %cst_10 = arith.constant dense<0.000000e+00> : vector<128x128xf32>
    %15 = tpu.matmul %13, %14, %cst_10 {dimension_numbers = #tpu.dot_dimension_numbers<[1], [0], [0], [1], [0, 0, 1, 1], [], []>} : vector<128x128xf32>, vector<128x128xf32>, vector<128x128xf32> -> vector<128x128xf32>
    %c0_11 = arith.constant 0 : index
    %c0_12 = arith.constant 0 : index
    %16 = vector.load %arg5[%c0_11, %c0_12] : memref<1x128xf32, #tpu.memory_space<vmem>>, vector<1x128xf32>
    %17 = vector.broadcast %16 : vector<1x128xf32> to vector<128x128xf32>
    %18 = arith.addf %15, %17 : vector<128x128xf32>
    %c0_13 = arith.constant 0 : index
    %c0_14 = arith.constant 0 : index
    %19 = vector.load %arg6[%c0_13, %c0_14] : memref<128x128xf32, #tpu.memory_space<vmem>>, vector<128x128xf32>
    tpu.vector_store %arg6[%c0_13, %c0_14], %18 {strides = array<i32>} : memref<128x128xf32, #tpu.memory_space<vmem>>, vector<128x128xf32>,
    return
  }
  func.func @transform_0(%arg0: i32) -> (i32, i32) {
    %c0_i32 = arith.constant 0 : i32
    %c0_i32_0 = arith.constant 0 : i32
    return %arg0, %c0_i32 : i32, i32
  }
  func.func @transform_1(%arg0: i32) -> (i32, i32) {
    %c0_i32 = arith.constant 0 : i32
    %c0_i32_0 = arith.constant 0 : i32
    %c0_i32_1 = arith.constant 0 : i32
    return %c0_i32, %c0_i32_0 : i32, i32
  }
  func.func @transform_2(%arg0: i32) -> (i32, i32) {
    %c0_i32 = arith.constant 0 : i32
    %c0_i32_0 = arith.constant 0 : i32
    %c0_i32_1 = arith.constant 0 : i32
    return %c0_i32, %c0_i32_0 : i32, i32
  }
  func.func @transform_3(%arg0: i32) -> (i32, i32) {
    %c0_i32 = arith.constant 0 : i32
    %c0_i32_0 = arith.constant 0 : i32
    %c0_i32_1 = arith.constant 0 : i32
    return %c0_i32, %c0_i32_0 : i32, i32
  }
  func.func @transform_4(%arg0: i32) -> (i32, i32) {
    %c0_i32 = arith.constant 0 : i32
    %c0_i32_0 = arith.constant 0 : i32
    %c0_i32_1 = arith.constant 0 : i32
    return %c0_i32, %c0_i32_0 : i32, i32
  }
  func.func @transform_5(%arg0: i32) -> (i32, i32) {
    %c0_i32 = arith.constant 0 : i32
    %c0_i32_0 = arith.constant 0 : i32
    return %arg0, %c0_i32 : i32, i32
  }
}

</mosaic_0001>

<llo_original>
// kernel: tpu_custom_call.1
$region0: #{tpu_custom_call.1}
  #allocation0 [shape = 'u32[]', space=smem, size = 0x4, offset = 0x4, fixed_abs, tag = 'smem constant byte address 0x4 - core index']
  #allocation1 [shape = 'u32[144,128]{1,0:T(1,128)}', space=vmem, size = 0x12000, scoped, tag = 'internal scratch']
  %s0 = inlined_call_operand.hbm [shape: f32[128,128], index: 0, kind: input, shape index: {}]
  %s1 = inlined_call_operand.hbm [shape: f32[128,128], index: 1, kind: input, shape index: {}]
  %s2 = inlined_call_operand.vmem [shape: f32[1,128], index: 2, kind: input, shape index: {}]
  %s3 = inlined_call_operand.hbm [shape: f32[128,128], index: 3, kind: input, shape index: {}]
  %s4 = inlined_call_operand.vmem [shape: f32[1,128], index: 4, kind: input, shape index: {}]
  %s5 = inlined_call_operand.hbm [shape: f32[128,128], index: 5, kind: output, shape index: {}]
  %s6 = sld [smem:[#allocation0]]
  $region42: #{tpu_custom_call.1} parent=0
    _
  %s8 = ssub.s32 1, %s6
  %s9 = scalar_select 0, %s8, %s6
  $region1: #{tpu_custom_call.1} parent=0
    #allocation2 [shape = 'u8[65536]{0}', space=vmem, size = 0x10000, scoped, tag = 'input window, operand 0, single buffered']
    #allocation3 [shape = 's32[1]{0}', space=sflag, size = 0x4, scoped, tag = 'scoped memory for tpu_custom_call.1']
    #allocation4 [shape = 's32[1]{0}', space=sflag, size = 0x4, scoped, tag = 'scoped memory for tpu_custom_call.1']
    #allocation5 [shape = 'u8[65536]{0}', space=vmem, size = 0x10000, scoped, tag = 'input window, operand 1, single buffered']
    #allocation6 [shape = 's32[1]{0}', space=sflag, size = 0x4, scoped, tag = 'scoped memory for tpu_custom_call.1']
    #allocation7 [shape = 'u8[65536]{0}', space=vmem, size = 0x10000, scoped, tag = 'input window, operand 3, single buffered']
    #allocation8 [shape = 'u8[65536]{0}', space=vmem, size = 0x10000, scoped, tag = 'output window, operand 0, single buffered']
    %10 = vsyncpa [#allocation3], 0
    %11 = vsyncpa [#allocation6], 0
    %12 = vsyncpa [#allocation4], 0
    // Predicated region
    $region2: #{tpu_custom_call.1} parent=1 // pred_check
      _
    $region3: #{tpu_custom_call.1} parent=1 // pred_check_branch
      %14 = sbr.rel (0) target = $region5
    $region4: #{tpu_custom_call.1} parent=1 // pred_region
      %s16 = ssub.s32 2048, 2048
      %17 = vsyncadd [#allocation3], %s16
      %s18 = sshll.u32 [#allocation2], 4
      %s19 = int_to_ptr.vmem [resolvable:$true] %s18
      %24 = dma.hbm_to_vmem [thread:$0]  %s0, 2048, %s19, [#allocation3], 128, 128, 8
    $region5: #{tpu_custom_call.1} parent=1 // pred_fallthru
      _
    // Predicated region
    $region6: #{tpu_custom_call.1} parent=1 // pred_check
      _
    $region7: #{tpu_custom_call.1} parent=1 // pred_check_branch
      %26 = sbr.rel (0) target = $region9
    $region8: #{tpu_custom_call.1} parent=1 // pred_region
      %s28 = ssub.s32 2048, 2048
      %29 = vsyncadd [#allocation6], %s28
      %s30 = sshll.u32 [#allocation5], 4
      %s31 = int_to_ptr.vmem [resolvable:$true] %s30
      %36 = dma.hbm_to_vmem [thread:$0]  %s1, 2048, %s31, [#allocation6], 128, 128, 8
    $region9: #{tpu_custom_call.1} parent=1 // pred_fallthru
      _
    // Predicated region
    $region10: #{tpu_custom_call.1} parent=1 // pred_check
      _
    $region11: #{tpu_custom_call.1} parent=1 // pred_check_branch
      %38 = sbr.rel (0) target = $region13
    $region12: #{tpu_custom_call.1} parent=1 // pred_region
      _
    $region13: #{tpu_custom_call.1} parent=1 // pred_fallthru
      _
    // Predicated region
    $region14: #{tpu_custom_call.1} parent=1 // pred_check
      _
    $region15: #{tpu_custom_call.1} parent=1 // pred_check_branch
      %40 = sbr.rel (0) target = $region17
    $region16: #{tpu_custom_call.1} parent=1 // pred_region
      %s42 = ssub.s32 2048, 2048
      %43 = vsyncadd [#allocation6], %s42
      %s44 = sshll.u32 [#allocation7], 4
      %s45 = int_to_ptr.vmem [resolvable:$true] %s44
      %50 = dma.hbm_to_vmem [thread:$0]  %s3, 2048, %s45, [#allocation6], 128, 128, 8
    $region17: #{tpu_custom_call.1} parent=1 // pred_fallthru
      _
    // Predicated region
    $region18: #{tpu_custom_call.1} parent=1 // pred_check
      _
    $region19: #{tpu_custom_call.1} parent=1 // pred_check_branch
      %52 = sbr.rel (0) target = $region21
    $region20: #{tpu_custom_call.1} parent=1 // pred_region
      _
    $region21: #{tpu_custom_call.1} parent=1 // pred_fallthru
      _
    // Predicated region
    $region22: #{tpu_custom_call.1} parent=1 // pred_check
      _
    $region23: #{tpu_custom_call.1} parent=1 // pred_check_branch
      %54 = sbr.rel (0) target = $region25
    $region24: #{tpu_custom_call.1} parent=1 // pred_region
      %55 = dma.done [#allocation3], 2048
    $region25: #{tpu_custom_call.1} parent=1 // pred_fallthru
      _
    // Predicated region
    $region26: #{tpu_custom_call.1} parent=1 // pred_check
      _
    $region27: #{tpu_custom_call.1} parent=1 // pred_check_branch
      %57 = sbr.rel (0) target = $region29
    $region28: #{tpu_custom_call.1} parent=1 // pred_region
      %58 = dma.done [#allocation6], 2048
    $region29: #{tpu_custom_call.1} parent=1 // pred_fallthru
      _
    // Predicated region
    $region30: #{tpu_custom_call.1} parent=1 // pred_check
      _
    $region31: #{tpu_custom_call.1} parent=1 // pred_check_branch
      %60 = sbr.rel (0) target = $region33
    $region32: #{tpu_custom_call.1} parent=1 // pred_region
      %61 = dma.done [#allocation6], 2048
    $region33: #{tpu_custom_call.1} parent=1 // pred_fallthru
      _
    %v62 = vld [vmem:[#allocation2] sm:$0xff]
    %v63 = vld [vmem:[#allocation2 + $0x8] sm:$0xff]
    %v64 = vld [vmem:[#allocation2 + $0x10] sm:$0xff]
    %v65 = vld [vmem:[#allocation2 + $0x18] sm:$0xff]
    %v66 = vld [vmem:[#allocation2 + $0x20] sm:$0xff]
    %v67 = vld [vmem:[#allocation2 + $0x28] sm:$0xff]
    %v68 = vld [vmem:[#allocation2 + $0x30] sm:$0xff]
    %v69 = vld [vmem:[#allocation2 + $0x38] sm:$0xff]
    %v70 = vld [vmem:[#allocation2 + $0x40] sm:$0xff]
    %v71 = vld [vmem:[#allocation2 + $0x48] sm:$0xff]
    %v72 = vld [vmem:[#allocation2 + $0x50] sm:$0xff]
    %v73 = vld [vmem:[#allocation2 + $0x58] sm:$0xff]
    %v74 = vld [vmem:[#allocation2 + $0x60] sm:$0xff]
    %v75 = vld [vmem:[#allocation2 + $0x68] sm:$0xff]
    %v76 = vld [vmem:[#allocation2 + $0x70] sm:$0xff]
    %v77 = vld [vmem:[#allocation2 + $0x78] sm:$0xff]
    %v78 = vld [vmem:[#allocation5] sm:$0xff]
    %v79 = vld [vmem:[#allocation5 + $0x8] sm:$0xff]
    %v80 = vld [vmem:[#allocation5 + $0x10] sm:$0xff]
    %v81 = vld [vmem:[#allocation5 + $0x18] sm:$0xff]
    %v82 = vld [vmem:[#allocation5 + $0x20] sm:$0xff]
    %v83 = vld [vmem:[#allocation5 + $0x28] sm:$0xff]
    %v84 = vld [vmem:[#allocation5 + $0x30] sm:$0xff]
    %v85 = vld [vmem:[#allocation5 + $0x38] sm:$0xff]
    %v86 = vld [vmem:[#allocation5 + $0x40] sm:$0xff]
    %v87 = vld [vmem:[#allocation5 + $0x48] sm:$0xff]
    %v88 = vld [vmem:[#allocation5 + $0x50] sm:$0xff]
    %v89 = vld [vmem:[#allocation5 + $0x58] sm:$0xff]
    %v90 = vld [vmem:[#allocation5 + $0x60] sm:$0xff]
    %v91 = vld [vmem:[#allocation5 + $0x68] sm:$0xff]
    %v92 = vld [vmem:[#allocation5 + $0x70] sm:$0xff]
    %v93 = vld [vmem:[#allocation5 + $0x78] sm:$0xff]
    %v94 = vld [vmem:[%s2] sm:$0x1]
    %v96 = vlaneseq
    %v97 = vshrl.u32 %v96, 7
    %v98 = vsub.s32 0, %v97
    %v99 = vrot.slane %v94, %v98
    %101 = vmatprep.subr.mxu0 0.0
    %102 = vmatpush1.msra.mxu0 %v93
    %103 = vmatprep.subr.mxu0 0.0
    %104 = vmatpush1.msra.mxu0 %v92
    %105 = vmatprep.subr.mxu0 0.0
    %106 = vmatpush1.msra.mxu0 %v91
    %107 = vmatprep.subr.mxu0 0.0
    %108 = vmatpush1.msra.mxu0 %v90
    %109 = vmatprep.subr.mxu0 0.0
    %110 = vmatpush1.msra.mxu0 %v89
    %111 = vmatprep.subr.mxu0 0.0
    %112 = vmatpush1.msra.mxu0 %v88
    %113 = vmatprep.subr.mxu0 0.0
    %114 = vmatpush1.msra.mxu0 %v87
    %115 = vmatprep.subr.mxu0 0.0
    %116 = vmatpush1.msra.mxu0 %v86
    %117 = vmatprep.subr.mxu0 0.0
    %118 = vmatpush1.msra.mxu0 %v85
    %119 = vmatprep.subr.mxu0 0.0
    %120 = vmatpush1.msra.mxu0 %v84
    %121 = vmatprep.subr.mxu0 0.0
    %122 = vmatpush1.msra.mxu0 %v83
    %123 = vmatprep.subr.mxu0 0.0
    %124 = vmatpush1.msra.mxu0 %v82
    %125 = vmatprep.subr.mxu0 0.0
    %126 = vmatpush1.msra.mxu0 %v81
    %127 = vmatprep.subr.mxu0 0.0
    %128 = vmatpush1.msra.mxu0 %v80
    %129 = vmatprep.subr.mxu0 0.0
    %130 = vmatpush1.msra.mxu0 %v79
    %131 = vmatprep.subr.mxu0 0.0
    %132 = vmatpush1.msra.mxu0 %v78
    %133 = vmatprep.subr.mxu0 0.0
    %134 = vmatpush2.msra.mxu0 0.0
    %135 = vmatprep.subr.mxu0 0.0
    %136 = vmatpush2.msra.mxu0 0.0
    %137 = vmatprep.subr.mxu0 0.0
    %138 = vmatpush2.msra.mxu0 0.0
    %139 = vmatprep.subr.mxu0 0.0
    %140 = vmatpush2.msra.mxu0 0.0
    %141 = vmatprep.subr.mxu0 0.0
    %142 = vmatpush2.msra.mxu0 0.0
    %143 = vmatprep.subr.mxu0 0.0
    %144 = vmatpush2.msra.mxu0 0.0
    %145 = vmatprep.subr.mxu0 0.0
    %146 = vmatpush2.msra.mxu0 0.0
    %147 = vmatprep.subr.mxu0 0.0
    %148 = vmatpush2.msra.mxu0 0.0
    %149 = vmatprep.subr.mxu0 0.0
    %150 = vmatpush2.msra.mxu0 0.0
    %151 = vmatprep.subr.mxu0 0.0
    %152 = vmatpush2.msra.mxu0 0.0
    %153 = vmatprep.subr.mxu0 0.0
    %154 = vmatpush2.msra.mxu0 0.0
    %155 = vmatprep.subr.mxu0 0.0
    %156 = vmatpush2.msra.mxu0 0.0
    %157 = vmatprep.subr.mxu0 0.0
    %158 = vmatpush2.msra.mxu0 0.0
    %159 = vmatprep.subr.mxu0 0.0
    %160 = vmatpush2.msra.mxu0 0.0
    %161 = vmatprep.subr.mxu0 0.0
    %162 = vmatpush2.msra.mxu0 0.0
    %163 = vmatprep.subr.mxu0 0.0
    %164 = vmatpush2.msra.mxu0 0.0
    %165 = vmatprep.mubr.f32.mxu0 0.0
    %166 = vmatmul.mubr.f32.gmra.mxu0 %v62
    %v167 = vpop.f32.mrf.mxu0
    %v168 = vadd.f32 %v99, %v167
    %v169 = vpop.f32.mrf.mxu0
    %170 = vmatprep.mubr.f32.mxu0 0.0
    %171 = vmatmul.mubr.f32.gmra.mxu0 %v63
    %v172 = vpop.f32.mrf.mxu0
    %v173 = vadd.f32 %v99, %v172
    %v174 = vpop.f32.mrf.mxu0
    %175 = vmatprep.mubr.f32.mxu0 0.0
    %176 = vmatmul.mubr.f32.gmra.mxu0 %v64
    %v177 = vpop.f32.mrf.mxu0
    %v178 = vadd.f32 %v99, %v177
    %v179 = vpop.f32.mrf.mxu0
    %180 = vmatprep.mubr.f32.mxu0 0.0
    %181 = vmatmul.mubr.f32.gmra.mxu0 %v65
    %v182 = vpop.f32.mrf.mxu0
    %v183 = vadd.f32 %v99, %v182
    %v184 = vpop.f32.mrf.mxu0
    %185 = vmatprep.mubr.f32.mxu0 0.0
    %186 = vmatmul.mubr.f32.gmra.mxu0 %v66
    %v187 = vpop.f32.mrf.mxu0
    %v188 = vadd.f32 %v99, %v187
    %v189 = vpop.f32.mrf.mxu0
    %190 = vmatprep.mubr.f32.mxu0 0.0
    %191 = vmatmul.mubr.f32.gmra.mxu0 %v67
    %v192 = vpop.f32.mrf.mxu0
    %v193 = vadd.f32 %v99, %v192
    %v194 = vpop.f32.mrf.mxu0
    %195 = vmatprep.mubr.f32.mxu0 0.0
    %196 = vmatmul.mubr.f32.gmra.mxu0 %v68
    %v197 = vpop.f32.mrf.mxu0
    %v198 = vadd.f32 %v99, %v197
    %v199 = vpop.f32.mrf.mxu0
    %200 = vmatprep.mubr.f32.mxu0 0.0
    %201 = vmatmul.mubr.f32.gmra.mxu0 %v69
    %v202 = vpop.f32.mrf.mxu0
    %v203 = vadd.f32 %v99, %v202
    %v204 = vpop.f32.mrf.mxu0
    %205 = vmatprep.mubr.f32.mxu0 0.0
    %206 = vmatmul.mubr.f32.gmra.mxu0 %v70
    %v207 = vpop.f32.mrf.mxu0
    %v208 = vadd.f32 %v99, %v207
    %v209 = vpop.f32.mrf.mxu0
    %210 = vmatprep.mubr.f32.mxu0 0.0
    %211 = vmatmul.mubr.f32.gmra.mxu0 %v71
    %v212 = vpop.f32.mrf.mxu0
    %v213 = vadd.f32 %v99, %v212
    %v214 = vpop.f32.mrf.mxu0
    %215 = vmatprep.mubr.f32.mxu0 0.0
    %216 = vmatmul.mubr.f32.gmra.mxu0 %v72
    %v217 = vpop.f32.mrf.mxu0
    %v218 = vadd.f32 %v99, %v217
    %v219 = vpop.f32.mrf.mxu0
    %220 = vmatprep.mubr.f32.mxu0 0.0
    %221 = vmatmul.mubr.f32.gmra.mxu0 %v73
    %v222 = vpop.f32.mrf.mxu0
    %v223 = vadd.f32 %v99, %v222
    %v224 = vpop.f32.mrf.mxu0
    %225 = vmatprep.mubr.f32.mxu0 0.0
    %226 = vmatmul.mubr.f32.gmra.mxu0 %v74
    %v227 = vpop.f32.mrf.mxu0
    %v228 = vadd.f32 %v99, %v227
    %v229 = vpop.f32.mrf.mxu0
    %230 = vmatprep.mubr.f32.mxu0 0.0
    %231 = vmatmul.mubr.f32.gmra.mxu0 %v75
    %v232 = vpop.f32.mrf.mxu0
    %v233 = vadd.f32 %v99, %v232
    %v234 = vpop.f32.mrf.mxu0
    %235 = vmatprep.mubr.f32.mxu0 0.0
    %236 = vmatmul.mubr.f32.gmra.mxu0 %v76
    %v237 = vpop.f32.mrf.mxu0
    %v238 = vadd.f32 %v99, %v237
    %v239 = vpop.f32.mrf.mxu0
    %240 = vmatprep.mubr.f32.mxu0 0.0
    %241 = vmatmul.mubr.f32.gmra.mxu0 %v77
    %v242 = vpop.f32.mrf.mxu0
    %v243 = vadd.f32 %v99, %v242
    %v244 = vpop.f32.mrf.mxu0
    %245 = vdwg.mxu0
    %v246 = vmul.f32 %v168, 0.5
    %v247 = vmul.f32 %v173, 0.5
    %v248 = vmul.f32 %v178, 0.5
    %v249 = vmul.f32 %v183, 0.5
    %v250 = vmul.f32 %v188, 0.5
    %v251 = vmul.f32 %v193, 0.5
    %v252 = vmul.f32 %v198, 0.5
    %v253 = vmul.f32 %v203, 0.5
    %v254 = vmul.f32 %v208, 0.5
    %v255 = vmul.f32 %v213, 0.5
    %v256 = vmul.f32 %v218, 0.5
    %v257 = vmul.f32 %v223, 0.5
    %v258 = vmul.f32 %v228, 0.5
    %v259 = vmul.f32 %v233, 0.5
    %v260 = vmul.f32 %v238, 0.5
    %v261 = vmul.f32 %v243, 0.5
    %v262 = vmul.f32 %v168, 0.70710677
    %v263 = vmul.f32 %v173, 0.70710677
    %v264 = vmul.f32 %v178, 0.70710677
    %v265 = vmul.f32 %v183, 0.70710677
    %v266 = vmul.f32 %v188, 0.70710677
    %v267 = vmul.f32 %v193, 0.70710677
    %v268 = vmul.f32 %v198, 0.70710677
    %v269 = vmul.f32 %v203, 0.70710677
    %v270 = vmul.f32 %v208, 0.70710677
    %v271 = vmul.f32 %v213, 0.70710677
    %v272 = vmul.f32 %v218, 0.70710677
    %v273 = vmul.f32 %v223, 0.70710677
    %v274 = vmul.f32 %v228, 0.70710677
    %v275 = vmul.f32 %v233, 0.70710677
    %v276 = vmul.f32 %v238, 0.70710677
    %v277 = vmul.f32 %v243, 0.70710677
    %v278 = verf.f32.pop %v262
    %v279 = verf.f32.pop %v263
    %v280 = verf.f32.pop %v264
    %v281 = verf.f32.pop %v265
    %v282 = verf.f32.pop %v266
    %v283 = verf.f32.pop %v267
    %v284 = verf.f32.pop %v268
    %v285 = verf.f32.pop %v269
    %v286 = verf.f32.pop %v270
    %v287 = verf.f32.pop %v271
    %v288 = verf.f32.pop %v272
    %v289 = verf.f32.pop %v273
    %v290 = verf.f32.pop %v274
    %v291 = verf.f32.pop %v275
    %v292 = verf.f32.pop %v276
    %v293 = verf.f32.pop %v277
    %v294 = vadd.f32 %v278, 1.0
    %v295 = vadd.f32 %v279, 1.0
    %v296 = vadd.f32 %v280, 1.0
    %v297 = vadd.f32 %v281, 1.0
    %v298 = vadd.f32 %v282, 1.0
    %v299 = vadd.f32 %v283, 1.0
    %v300 = vadd.f32 %v284, 1.0
    %v301 = vadd.f32 %v285, 1.0
    %v302 = vadd.f32 %v286, 1.0
    %v303 = vadd.f32 %v287, 1.0
    %v304 = vadd.f32 %v288, 1.0
    %v305 = vadd.f32 %v289, 1.0
    %v306 = vadd.f32 %v290, 1.0
    %v307 = vadd.f32 %v291, 1.0
    %v308 = vadd.f32 %v292, 1.0
    %v309 = vadd.f32 %v293, 1.0
    %v310 = vmul.f32 %v246, %v294
    %v311 = vmul.f32 %v247, %v295
    %v312 = vmul.f32 %v248, %v296
    %v313 = vmul.f32 %v249, %v297
    %v314 = vmul.f32 %v250, %v298
    %v315 = vmul.f32 %v251, %v299
    %v316 = vmul.f32 %v252, %v300
    %v317 = vmul.f32 %v253, %v301
    %v318 = vmul.f32 %v254, %v302
    %v319 = vmul.f32 %v255, %v303
    %v320 = vmul.f32 %v256, %v304
    %v321 = vmul.f32 %v257, %v305
    %v322 = vmul.f32 %v258, %v306
    %v323 = vmul.f32 %v259, %v307
    %v324 = vmul.f32 %v260, %v308
    %v325 = vmul.f32 %v261, %v309
    %v326 = vld [vmem:[#allocation7] sm:$0xff]
    %v327 = vld [vmem:[#allocation7 + $0x8] sm:$0xff]
    %v328 = vld [vmem:[#allocation7 + $0x10] sm:$0xff]
    %v329 = vld [vmem:[#allocation7 + $0x18] sm:$0xff]
    %v330 = vld [vmem:[#allocation7 + $0x20] sm:$0xff]
    %v331 = vld [vmem:[#allocation7 + $0x28] sm:$0xff]
    %v332 = vld [vmem:[#allocation7 + $0x30] sm:$0xff]
    %v333 = vld [vmem:[#allocation7 + $0x38] sm:$0xff]
    %v334 = vld [vmem:[#allocation7 + $0x40] sm:$0xff]
    %v335 = vld [vmem:[#allocation7 + $0x48] sm:$0xff]
    %v336 = vld [vmem:[#allocation7 + $0x50] sm:$0xff]
    %v337 = vld [vmem:[#allocation7 + $0x58] sm:$0xff]
    %v338 = vld [vmem:[#allocation7 + $0x60] sm:$0xff]
    %v339 = vld [vmem:[#allocation7 + $0x68] sm:$0xff]
    %v340 = vld [vmem:[#allocation7 + $0x70] sm:$0xff]
    %v341 = vld [vmem:[#allocation7 + $0x78] sm:$0xff]
    %v342 = vld [vmem:[%s4] sm:$0x1]
    %v344 = vlaneseq
    %v345 = vshrl.u32 %v344, 7
    %v346 = vsub.s32 0, %v345
    %v347 = vrot.slane %v342, %v346
    %349 = vmatprep.subr.mxu0 0.0
    %350 = vmatpush1.msra.mxu0 %v341
    %351 = vmatprep.subr.mxu0 0.0
    %352 = vmatpush1.msra.mxu0 %v340
    %353 = vmatprep.subr.mxu0 0.0
    %354 = vmatpush1.msra.mxu0 %v339
    %355 = vmatprep.subr.mxu0 0.0
    %356 = vmatpush1.msra.mxu0 %v338
    %357 = vmatprep.subr.mxu0 0.0
    %358 = vmatpush1.msra.mxu0 %v337
    %359 = vmatprep.subr.mxu0 0.0
    %360 = vmatpush1.msra.mxu0 %v336
    %361 = vmatprep.subr.mxu0 0.0
    %362 = vmatpush1.msra.mxu0 %v335
    %363 = vmatprep.subr.mxu0 0.0
    %364 = vmatpush1.msra.mxu0 %v334
    %365 = vmatprep.subr.mxu0 0.0
    %366 = vmatpush1.msra.mxu0 %v333
    %367 = vmatprep.subr.mxu0 0.0
    %368 = vmatpush1.msra.mxu0 %v332
    %369 = vmatprep.subr.mxu0 0.0
    %370 = vmatpush1.msra.mxu0 %v331
    %371 = vmatprep.subr.mxu0 0.0
    %372 = vmatpush1.msra.mxu0 %v330
    %373 = vmatprep.subr.mxu0 0.0
    %374 = vmatpush1.msra.mxu0 %v329
    %375 = vmatprep.subr.mxu0 0.0
    %376 = vmatpush1.msra.mxu0 %v328
    %377 = vmatprep.subr.mxu0 0.0
    %378 = vmatpush1.msra.mxu0 %v327
    %379 = vmatprep.subr.mxu0 0.0
    %380 = vmatpush1.msra.mxu0 %v326
    %381 = vmatprep.subr.mxu0 0.0
    %382 = vmatpush2.msra.mxu0 0.0
    %383 = vmatprep.subr.mxu0 0.0
    %384 = vmatpush2.msra.mxu0 0.0
    %385 = vmatprep.subr.mxu0 0.0
    %386 = vmatpush2.msra.mxu0 0.0
    %387 = vmatprep.subr.mxu0 0.0
    %388 = vmatpush2.msra.mxu0 0.0
    %389 = vmatprep.subr.mxu0 0.0
    %390 = vmatpush2.msra.mxu0 0.0
    %391 = vmatprep.subr.mxu0 0.0
    %392 = vmatpush2.msra.mxu0 0.0
    %393 = vmatprep.subr.mxu0 0.0
    %394 = vmatpush2.msra.mxu0 0.0
    %395 = vmatprep.subr.mxu0 0.0
    %396 = vmatpush2.msra.mxu0 0.0
    %397 = vmatprep.subr.mxu0 0.0
    %398 = vmatpush2.msra.mxu0 0.0
    %399 = vmatprep.subr.mxu0 0.0
    %400 = vmatpush2.msra.mxu0 0.0
    %401 = vmatprep.subr.mxu0 0.0
    %402 = vmatpush2.msra.mxu0 0.0
    %403 = vmatprep.subr.mxu0 0.0
    %404 = vmatpush2.msra.mxu0 0.0
    %405 = vmatprep.subr.mxu0 0.0
    %406 = vmatpush2.msra.mxu0 0.0
    %407 = vmatprep.subr.mxu0 0.0
    %408 = vmatpush2.msra.mxu0 0.0
    %409 = vmatprep.subr.mxu0 0.0
    %410 = vmatpush2.msra.mxu0 0.0
    %411 = vmatprep.subr.mxu0 0.0
    %412 = vmatpush2.msra.mxu0 0.0
    %413 = vmatprep.mubr.f32.mxu0 0.0
    %414 = vmatmul.mubr.f32.gmra.mxu0 %v310
    %v415 = vpop.f32.mrf.mxu0
    %v416 = vadd.f32 %v347, %v415
    %v417 = vpop.f32.mrf.mxu0
    %418 = vmatprep.mubr.f32.mxu0 0.0
    %419 = vmatmul.mubr.f32.gmra.mxu0 %v311
    %v420 = vpop.f32.mrf.mxu0
    %v421 = vadd.f32 %v347, %v420
    %v422 = vpop.f32.mrf.mxu0
    %423 = vmatprep.mubr.f32.mxu0 0.0
    %424 = vmatmul.mubr.f32.gmra.mxu0 %v312
    %v425 = vpop.f32.mrf.mxu0
    %v426 = vadd.f32 %v347, %v425
    %v427 = vpop.f32.mrf.mxu0
    %428 = vmatprep.mubr.f32.mxu0 0.0
    %429 = vmatmul.mubr.f32.gmra.mxu0 %v313
    %v430 = vpop.f32.mrf.mxu0
    %v431 = vadd.f32 %v347, %v430
    %v432 = vpop.f32.mrf.mxu0
    %433 = vmatprep.mubr.f32.mxu0 0.0
    %434 = vmatmul.mubr.f32.gmra.mxu0 %v314
    %v435 = vpop.f32.mrf.mxu0
    %v436 = vadd.f32 %v347, %v435
    %v437 = vpop.f32.mrf.mxu0
    %438 = vmatprep.mubr.f32.mxu0 0.0
    %439 = vmatmul.mubr.f32.gmra.mxu0 %v315
    %v440 = vpop.f32.mrf.mxu0
    %v441 = vadd.f32 %v347, %v440
    %v442 = vpop.f32.mrf.mxu0
    %443 = vmatprep.mubr.f32.mxu0 0.0
    %444 = vmatmul.mubr.f32.gmra.mxu0 %v316
    %v445 = vpop.f32.mrf.mxu0
    %v446 = vadd.f32 %v347, %v445
    %v447 = vpop.f32.mrf.mxu0
    %448 = vmatprep.mubr.f32.mxu0 0.0
    %449 = vmatmul.mubr.f32.gmra.mxu0 %v317
    %v450 = vpop.f32.mrf.mxu0
    %v451 = vadd.f32 %v347, %v450
    %v452 = vpop.f32.mrf.mxu0
    %453 = vmatprep.mubr.f32.mxu0 0.0
    %454 = vmatmul.mubr.f32.gmra.mxu0 %v318
    %v455 = vpop.f32.mrf.mxu0
    %v456 = vadd.f32 %v347, %v455
    %v457 = vpop.f32.mrf.mxu0
    %458 = vmatprep.mubr.f32.mxu0 0.0
    %459 = vmatmul.mubr.f32.gmra.mxu0 %v319
    %v460 = vpop.f32.mrf.mxu0
    %v461 = vadd.f32 %v347, %v460
    %v462 = vpop.f32.mrf.mxu0
    %463 = vmatprep.mubr.f32.mxu0 0.0
    %464 = vmatmul.mubr.f32.gmra.mxu0 %v320
    %v465 = vpop.f32.mrf.mxu0
    %v466 = vadd.f32 %v347, %v465
    %v467 = vpop.f32.mrf.mxu0
    %468 = vmatprep.mubr.f32.mxu0 0.0
    %469 = vmatmul.mubr.f32.gmra.mxu0 %v321
    %v470 = vpop.f32.mrf.mxu0
    %v471 = vadd.f32 %v347, %v470
    %v472 = vpop.f32.mrf.mxu0
    %473 = vmatprep.mubr.f32.mxu0 0.0
    %474 = vmatmul.mubr.f32.gmra.mxu0 %v322
    %v475 = vpop.f32.mrf.mxu0
    %v476 = vadd.f32 %v347, %v475
    %v477 = vpop.f32.mrf.mxu0
    %478 = vmatprep.mubr.f32.mxu0 0.0
    %479 = vmatmul.mubr.f32.gmra.mxu0 %v323
    %v480 = vpop.f32.mrf.mxu0
    %v481 = vadd.f32 %v347, %v480
    %v482 = vpop.f32.mrf.mxu0
    %483 = vmatprep.mubr.f32.mxu0 0.0
    %484 = vmatmul.mubr.f32.gmra.mxu0 %v324
    %v485 = vpop.f32.mrf.mxu0
    %v486 = vadd.f32 %v347, %v485
    %v487 = vpop.f32.mrf.mxu0
    %488 = vmatprep.mubr.f32.mxu0 0.0
    %489 = vmatmul.mubr.f32.gmra.mxu0 %v325
    %v490 = vpop.f32.mrf.mxu0
    %v491 = vadd.f32 %v347, %v490
    %v492 = vpop.f32.mrf.mxu0
    %493 = vdwg.mxu0
    %494 = vst [vmem:[#allocation8] sm:$0xff] %v416
    %495 = vst [vmem:[#allocation8 + $0x8] sm:$0xff] %v421
    %496 = vst [vmem:[#allocation8 + $0x10] sm:$0xff] %v426
    %497 = vst [vmem:[#allocation8 + $0x18] sm:$0xff] %v431
    %498 = vst [vmem:[#allocation8 + $0x20] sm:$0xff] %v436
    %499 = vst [vmem:[#allocation8 + $0x28] sm:$0xff] %v441
    %500 = vst [vmem:[#allocation8 + $0x30] sm:$0xff] %v446
    %501 = vst [vmem:[#allocation8 + $0x38] sm:$0xff] %v451
    %502 = vst [vmem:[#allocation8 + $0x40] sm:$0xff] %v456
    %503 = vst [vmem:[#allocation8 + $0x48] sm:$0xff] %v461
    %504 = vst [vmem:[#allocation8 + $0x50] sm:$0xff] %v466
    %505 = vst [vmem:[#allocation8 + $0x58] sm:$0xff] %v471
    %506 = vst [vmem:[#allocation8 + $0x60] sm:$0xff] %v476
    %507 = vst [vmem:[#allocation8 + $0x68] sm:$0xff] %v481
    %508 = vst [vmem:[#allocation8 + $0x70] sm:$0xff] %v486
    %509 = vst [vmem:[#allocation8 + $0x78] sm:$0xff] %v491
    // Predicated region
    $region34: #{tpu_custom_call.1} parent=1 // pred_check
      _
    $region35: #{tpu_custom_call.1} parent=1 // pred_check_branch
      %511 = sbr.rel (0) target = $region37
    $region36: #{tpu_custom_call.1} parent=1 // pred_region
      %s513 = ssub.s32 2048, 2048
      %514 = vsyncadd [#allocation4], %s513
      %s515 = sshll.u32 [#allocation8], 4
      %s516 = int_to_ptr.vmem [resolvable:$true] %s515
      %521 = dma.vmem_to_hbm [thread:$0]  %s516, 2048, %s5, [#allocation4], 128, 128, 8
    $region37: #{tpu_custom_call.1} parent=1 // pred_fallthru
      _
    // Predicated region
    $region38: #{tpu_custom_call.1} parent=1 // pred_check
      _
    $region39: #{tpu_custom_call.1} parent=1 // pred_check_branch
      %523 = sbr.rel (0) target = $region41
    $region40: #{tpu_custom_call.1} parent=1 // pred_region
      %524 = dma.done [#allocation4], 2048
    $region41: #{tpu_custom_call.1} parent=1 // pred_fallthru
      _
    %525 = vsyncpa [#allocation3], 1
    %526 = vsyncpa [#allocation6], 1
    %527 = vsyncpa [#allocation4], 1

</llo_original>
